<compile_context>
chip_gen: v7x
topology: tpu7x:2x2x1
jax: 0.10.0
libtpu: 0.0.40
codegen_flags: <defaults>
</compile_context>

<pallas_src>
import jax
import jax.numpy as jnp
from jax.experimental import pallas as pl
from jax.experimental.pallas import tpu as pltpu

# ---- module hyper-parameters (defaults of DISSL, shapes scaled down) --------
LAMBDA_MAXIMALITY = 2.3
BETA_DET_INV = 0.8
TEMPERATURE = 1.0
TEMPERATURE_ASSIGN = TEMPERATURE / 2.0       # temperature_assign = temperature / 2
INV_TEMPERATURE_ASSIGN = 1.0 / TEMPERATURE_ASSIGN
BN_EPS = 1e-5
TINY = 1e-30                                 # underflow guard for log(p_M)

# small synthetic shapes (real module: z_dim, C=16384, hid=1024, bottleneck=512)
BATCH = 8                 # per-crop batch; forward gets 2*BATCH rows
N_ROWS = 2 * BATCH
Z_DIM = 32
HID_DIM = 64
BOTTLENECK = 32
N_CLASSES = 256

# Class-tile width. At production shapes pick ~2048-4096 (bigger on the
# 128 MiB-VMEM parts); at the synthetic shapes 128 keeps the lane axis dense.
C_TILE = 128
NUM_C_TILES = N_CLASSES // C_TILE
N_ACC = 5                 # fused scalar accumulators


def _kernel_config():
    """(vmem_limit_bytes, cache_logits) chosen from the local chip's VMEM."""
    cap = 64 * 1024 * 1024
    try:
        info = pltpu.get_tpu_info()
        cap = int(getattr(info, "vmem_capacity_bytes", cap) or cap)
    except Exception:
        pass
    vmem_limit = min(100 * 1024 * 1024, int(0.85 * cap))
    cache_bytes = 2 * N_ROWS * N_CLASSES * 2          # la + lq, bf16
    # enable the logits cache only if it leaves >= half the budget for the
    # streamed weight tiles + per-tile intermediates (disables itself on v7x
    # at production shapes, enables on 128 MiB v5e/v6e and at test shapes).
    cache_logits = 2 * cache_bytes <= vmem_limit
    return vmem_limit, cache_logits


# --------------------------- trunk (projector MLP) ---------------------------
def _trunk_kernel(zt_ref, w1_ref, b1_ref, g1_ref, be1_ref,
                  w2_ref, b2_ref, g2_ref, be2_ref, h_ref):
    def lin_bn_relu(x, w, b, g, be):
        y = jnp.dot(x, w, preferred_element_type=jnp.float32) + b
        mu = jnp.mean(y, axis=0, keepdims=True)
        # E[x^2] - E[x]^2 variance (single cross-sublane pass).
        var = jnp.maximum(jnp.mean(y * y, axis=0, keepdims=True) - mu * mu, 0.0)
        y = (y - mu) * jax.lax.rsqrt(var + BN_EPS) * g + be
        return jnp.maximum(y, 0.0)

    h = lin_bn_relu(zt_ref[...], w1_ref[...], b1_ref[...], g1_ref[...], be1_ref[...])
    h = lin_bn_relu(h, w2_ref[...], b2_ref[...], g2_ref[...], be2_ref[...])
    h_ref[...] = h.astype(jnp.bfloat16)      # bf16 MXU operand for every class tile


# ------------------------------ main class loop -------------------------------
def _make_main_kernel(cache_logits):
    def kernel(z_ref, h_ref, w3_ref, b3_ref, wq_ref, bq_ref, out_ref,
               ma_ref, sa_ref, mq_ref, sq_ref, acc_ref, *cache_refs):
        phase = pl.program_id(0)       # 0: online-LSE pass, 1: reduction pass
        ct = pl.program_id(1)          # class-tile index
        n_ct = pl.num_programs(1)

        # -------- one-time state init ----------------------------------------
        @pl.when((phase == 0) & (ct == 0))
        def _init():
            ma_ref[...] = jnp.full_like(ma_ref, -jnp.inf)
            mq_ref[...] = jnp.full_like(mq_ref, -jnp.inf)
            sa_ref[...] = jnp.zeros_like(sa_ref)
            sq_ref[...] = jnp.zeros_like(sq_ref)
            for i in range(N_ACC):
                acc_ref[i] = jnp.float32(0.0)

        def compute_logits():
            la = jnp.dot(h_ref[...], w3_ref[...],
                         preferred_element_type=jnp.float32) + b3_ref[...]
            la = la * INV_TEMPERATURE_ASSIGN          # fold the divide
            lq = jnp.dot(z_ref[...], wq_ref[...],
                         preferred_element_type=jnp.float32) + bq_ref[...]
            if TEMPERATURE != 1.0:                    # /1.0 dropped entirely
                lq = lq * (1.0 / TEMPERATURE)
            return la, lq

        # -------- pass 0: logits + online max / sum-exp per row ---------------
        @pl.when(phase == 0)
        def _lse_pass():
            la, lq = compute_logits()
            if cache_logits:
                la_c_ref, lq_c_ref = cache_refs
                la16 = la.astype(jnp.bfloat16)
                lq16 = lq.astype(jnp.bfloat16)
                la_c_ref[ct] = la16
                lq_c_ref[ct] = lq16
                # Keep pass-0 LSE consistent with the bf16-rounded logits that
                # pass 1 will read back.
                la = la16.astype(jnp.float32)
                lq = lq16.astype(jnp.float32)

            ma_old = ma_ref[...]
            ma_new = jnp.maximum(ma_old, jnp.max(la, axis=-1, keepdims=True))
            sa_ref[...] = (sa_ref[...] * jnp.exp(ma_old - ma_new)
                           + jnp.sum(jnp.exp(la - ma_new), axis=-1, keepdims=True))
            ma_ref[...] = ma_new

            mq_old = mq_ref[...]
            mq_new = jnp.maximum(mq_old, jnp.max(lq, axis=-1, keepdims=True))
            sq_ref[...] = (sq_ref[...] * jnp.exp(mq_old - mq_new)
                           + jnp.sum(jnp.exp(lq - mq_new), axis=-1, keepdims=True))
            mq_ref[...] = mq_new

        # -------- pass 1: fused, linearized per-tile reductions ----------------
        @pl.when(phase == 1)
        def _reduce_pass():
            if cache_logits:
                la_c_ref, lq_c_ref = cache_refs
                la = la_c_ref[ct].astype(jnp.float32)
                lq = lq_c_ref[ct].astype(jnp.float32)
            else:
                la, lq = compute_logits()

            inv_sa = pl.reciprocal(sa_ref[...], approx=False)
            p = jnp.exp(la - ma_ref[...]) * inv_sa    # single exp per tile

            b = N_ROWS // 2                           # crops_assign = crops_pred = 2
            p0, p1 = p[:b], p[b:]
            la0, la1 = la[:b], la[b:]
            lq0, lq1 = lq[:b], lq[b:]

            # Linearized CE/entropy terms: sum(pX * log_Y) = sum(pX * logits_Y)
            # minus a per-row lse_Y correction applied once in finalize
            # (since sum_tiles rowsum(pX) == 1).  Paired terms fused -> one
            # cross-lane reduce each.
            acc_ref[0] += jnp.sum(p0 * la1 + p1 * la0)    # CE[p, p_other] raw
            acc_ref[1] += jnp.sum(p0 * lq1 + p1 * lq0)    # CE[p, q_other] raw
            acc_ref[2] += jnp.sum(p0 * lq0 + p1 * lq1)    # CE[p, q_same]  raw
            acc_ref[3] += jnp.sum(p * la)                 # -H[M|Z] raw

            pM0 = jnp.mean(p0, axis=0, keepdims=True)     # [1, C_TILE]
            pM1 = jnp.mean(p1, axis=0, keepdims=True)
            # Underflow-guarded x*log(x) (avoids 0 * -inf = NaN at real C=16384).
            xlogx = (jnp.where(pM0 > 0.0, pM0 * jnp.log(jnp.maximum(pM0, TINY)), 0.0)
                     + jnp.where(pM1 > 0.0, pM1 * jnp.log(jnp.maximum(pM1, TINY)), 0.0))
            acc_ref[4] += jnp.sum(xlogx)                  # -2*H[M] partial

        # -------- finalize: apply LSE corrections, write SMEM output -----------
        @pl.when((phase == 1) & (ct == n_ct - 1))
        def _finalize():
            s_lse_a = jnp.sum(ma_ref[...] + jnp.log(sa_ref[...]))
            s_lse_q = jnp.sum(mq_ref[...] + jnp.log(sq_ref[...]))
            inv_n = 1.0 / float(N_ROWS)
            CE_det_inv = -(acc_ref[0] - s_lse_a) * inv_n
            CE_distill_aug = -(acc_ref[1] - s_lse_q) * inv_n
            CE_distill_same = -(acc_ref[2] - s_lse_q) * inv_n
            H_Mlz = -(acc_ref[3] - s_lse_a) * inv_n
            H_M = -0.5 * acc_ref[4]
            loss = (CE_distill_aug
                    - LAMBDA_MAXIMALITY * H_M
                    + BETA_DET_INV * CE_det_inv)
            out_ref[0] = loss
            out_ref[1] = H_M
            out_ref[2] = H_Mlz
            out_ref[3] = CE_det_inv - H_Mlz
            out_ref[4] = CE_distill_same - H_Mlz
            out_ref[5] = CE_distill_aug

    return kernel


def dissl_forward(z, z_tgt, params):
    vmem_limit, cache_logits = _kernel_config()

    # ---- trunk: z_tgt -> bottleneck activations (bf16), single invocation ----
    h = pl.pallas_call(
        _trunk_kernel,
        out_shape=jax.ShapeDtypeStruct((N_ROWS, BOTTLENECK), jnp.bfloat16),
    )(z_tgt,
      params["w1"], params["b1"], params["g1"], params["be1"],
      params["w2"], params["b2"], params["g2"], params["be2"])

    # bf16 operands for the two large matmuls; z cast once here (hoisted).
    z16 = z.astype(jnp.bfloat16)
    w3_16 = params["w3"].astype(jnp.bfloat16)
    wq_16 = params["wq"].astype(jnp.bfloat16)

    grid = (2, NUM_C_TILES)     # (pass: LSE / reduce, class tile)

    def resident2d(shape):
        # Full-array block, constant index -> DMA'd once, resident all steps.
        return pl.BlockSpec(shape, lambda p, c: (0, 0))

    if cache_logits:
        # During pass 1 the weights are not read (logits come from the cache):
        # park the block index on the last tile so they are not re-streamed.
        def w_idx(p, c):
            return (0, c * (1 - p) + (NUM_C_TILES - 1) * p)
    else:
        def w_idx(p, c):
            return (0, c)

    in_specs = [
        resident2d((N_ROWS, Z_DIM)),                        # z (bf16)
        resident2d((N_ROWS, BOTTLENECK)),                   # h (bf16)
        pl.BlockSpec((BOTTLENECK, C_TILE), w_idx),          # w3 (bf16)
        pl.BlockSpec((1, C_TILE), w_idx),                   # b3
        pl.BlockSpec((Z_DIM, C_TILE), w_idx),               # wq (bf16)
        pl.BlockSpec((1, C_TILE), w_idx),                   # bq
    ]

    scratch = [
        pltpu.VMEM((N_ROWS, 1), jnp.float32),               # running max (assign)
        pltpu.VMEM((N_ROWS, 1), jnp.float32),               # running sum-exp (assign)
        pltpu.VMEM((N_ROWS, 1), jnp.float32),               # running max (predict)
        pltpu.VMEM((N_ROWS, 1), jnp.float32),               # running sum-exp (predict)
        pltpu.SMEM((8,), jnp.float32),                      # scalar accumulators
    ]
    if cache_logits:
        scratch.append(pltpu.VMEM((NUM_C_TILES, N_ROWS, C_TILE), jnp.bfloat16))  # la cache
        scratch.append(pltpu.VMEM((NUM_C_TILES, N_ROWS, C_TILE), jnp.bfloat16))  # lq cache

    out = pl.pallas_call(
        _make_main_kernel(cache_logits),
        out_shape=jax.ShapeDtypeStruct((6,), jnp.float32),
        grid=grid,
        in_specs=in_specs,
        out_specs=pl.BlockSpec((6,), lambda p, c: (0,),
                               memory_space=pltpu.MemorySpace.SMEM),
        scratch_shapes=scratch,
        compiler_params=pltpu.CompilerParams(
            # Both axes carry sequential state (online LSE + scalar accumulators).
            dimension_semantics=("arbitrary", "arbitrary"),
            vmem_limit_bytes=vmem_limit),
    )(z16, h, w3_16, params["b3"], wq_16, params["bq"])

    loss = out[0]
    logs = dict(H_M=out[1], H_Mlz=out[2], KL_invariance=out[3],
                KL_distillation=out[4], CE_distill_aug=out[5])
    return loss, logs


# ---------------- pure-JAX reference (mirrors kernel numerics) ----------------
def _reference(z, z_tgt, p, round_logits_bf16):
    def bn(x, g, be):
        mu = jnp.mean(x, axis=0, keepdims=True)
        var = jnp.maximum(jnp.mean(x * x, axis=0, keepdims=True) - mu * mu, 0.0)
        return (x - mu) * jax.lax.rsqrt(var + BN_EPS) * g + be

    h = jnp.maximum(bn(z_tgt @ p["w1"] + p["b1"], p["g1"], p["be1"]), 0.0)
    h = jnp.maximum(bn(h @ p["w2"] + p["b2"], p["g2"], p["be2"]), 0.0)
    la = (jnp.dot(h.astype(jnp.bfloat16), p["w3"].astype(jnp.bfloat16),
                  preferred_element_type=jnp.float32) + p["b3"]) / TEMPERATURE_ASSIGN
    lq = (jnp.dot(z.astype(jnp.bfloat16), p["wq"].astype(jnp.bfloat16),
                  preferred_element_type=jnp.float32) + p["bq"]) / TEMPERATURE
    if round_logits_bf16:   # mirror the kernel's bf16 logits cache
        la = la.astype(jnp.bfloat16).astype(jnp.float32)
        lq = lq.astype(jnp.bfloat16).astype(jnp.float32)
    log_p = jax.nn.log_softmax(la, axis=-1)
    prob = jnp.exp(log_p)
    log_q = jax.nn.log_softmax(lq, axis=-1)
    b = prob.shape[0] // 2
    p0, p1 = prob[:b], prob[b:]
    lp0, lp1 = log_p[:b], log_p[b:]
    lq0, lq1 = log_q[:b], log_q[b:]
    pM0 = jnp.mean(p0, 0)
    pM1 = jnp.mean(p1, 0)
    H_M = 0.5 * (-(pM0 * jnp.log(pM0)).sum() - (pM1 * jnp.log(pM1)).sum())
    CE_pp = 0.5 * (-(p0 * lp1).sum(-1).mean() - (p1 * lp0).sum(-1).mean())
    CE_aug = 0.5 * (-(p0 * lq1).sum(-1).mean() - (p1 * lq0).sum(-1).mean())
    CE_same = 0.5 * (-(p0 * lq0).sum(-1).mean() - (p1 * lq1).sum(-1).mean())
    H_Mlz = -(prob * log_p).sum(-1).mean()
    loss = CE_aug - LAMBDA_MAXIMALITY * H_M + BETA_DET_INV * CE_pp
    logs = dict(H_M=H_M, H_Mlz=H_Mlz, KL_invariance=CE_pp - H_Mlz,
                KL_distillation=CE_same - H_Mlz, CE_distill_aug=CE_aug)
    return loss, logs


def _init_params(key):
    ks = jax.random.split(key, 4)

    def lin(k, fan_in, fan_out):
        return (jax.random.normal(k, (fan_in, fan_out), jnp.float32)
                / jnp.sqrt(float(fan_in)))

    return dict(
        w1=lin(ks[0], Z_DIM, HID_DIM),      b1=jnp.zeros((1, HID_DIM), jnp.float32),
        g1=jnp.ones((1, HID_DIM), jnp.float32), be1=jnp.zeros((1, HID_DIM), jnp.float32),
        w2=lin(ks[1], HID_DIM, BOTTLENECK), b2=jnp.zeros((1, BOTTLENECK), jnp.float32),
        g2=jnp.ones((1, BOTTLENECK), jnp.float32), be2=jnp.zeros((1, BOTTLENECK), jnp.float32),
        w3=lin(ks[2], BOTTLENECK, N_CLASSES), b3=jnp.zeros((1, N_CLASSES), jnp.float32),
        wq=lin(ks[3], Z_DIM, N_CLASSES),    bq=jnp.zeros((1, N_CLASSES), jnp.float32),
    )


if __name__ == "__main__":
    key = jax.random.PRNGKey(0)
    k_z, k_zt, k_p = jax.random.split(key, 3)
    z = jax.random.normal(k_z, (N_ROWS, Z_DIM), jnp.float32)
    z_tgt = jax.random.normal(k_zt, (N_ROWS, Z_DIM), jnp.float32)
    params = _init_params(k_p)

    loss, logs = dissl_forward(z, z_tgt, params)
    loss = jax.block_until_ready(loss)

    _, cache_logits = _kernel_config()
    ref_loss, ref_logs = _reference(z, z_tgt, params, round_logits_bf16=cache_logits)
    assert jnp.allclose(loss, ref_loss, atol=5e-4, rtol=5e-4), (loss, ref_loss)
    for k in logs:
        assert jnp.allclose(logs[k], ref_logs[k], atol=2e-3, rtol=2e-3), (
            k, logs[k], ref_logs[k])
    assert bool(jnp.isfinite(loss)) and all(bool(jnp.isfinite(v)) for v in logs.values())
    print("KERNEL_OK")
</pallas_src>

<mosaic_0001>
module attributes {stable_mosaic.version = 11 : i64} {
  func.func @_trunk_kernel(%arg0: memref<16x32xf32, #tpu.memory_space<vmem>>, %arg1: memref<32x64xf32, #tpu.memory_space<vmem>>, %arg2: memref<1x64xf32, #tpu.memory_space<vmem>>, %arg3: memref<1x64xf32, #tpu.memory_space<vmem>>, %arg4: memref<1x64xf32, #tpu.memory_space<vmem>>, %arg5: memref<64x32xf32, #tpu.memory_space<vmem>>, %arg6: memref<1x32xf32, #tpu.memory_space<vmem>>, %arg7: memref<1x32xf32, #tpu.memory_space<vmem>>, %arg8: memref<1x32xf32, #tpu.memory_space<vmem>>, %arg9: memref<16x32xbf16, #tpu.memory_space<vmem>>) attributes {dimension_semantics = [], scalar_prefetch = 0 : i64, scratch_operands = 0 : i64, tpu.core_type = #tpu.core_type<tc>} {
    %c0 = arith.constant 0 : index
    %c0_0 = arith.constant 0 : index
    %0 = vector.load %arg0[%c0, %c0_0] : memref<16x32xf32, #tpu.memory_space<vmem>>, vector<16x32xf32>
    %c0_1 = arith.constant 0 : index
    %c0_2 = arith.constant 0 : index
    %1 = vector.load %arg1[%c0_1, %c0_2] : memref<32x64xf32, #tpu.memory_space<vmem>>, vector<32x64xf32>
    %c0_3 = arith.constant 0 : index
    %c0_4 = arith.constant 0 : index
    %2 = vector.load %arg2[%c0_3, %c0_4] : memref<1x64xf32, #tpu.memory_space<vmem>>, vector<1x64xf32>
    %c0_5 = arith.constant 0 : index
    %c0_6 = arith.constant 0 : index
    %3 = vector.load %arg3[%c0_5, %c0_6] : memref<1x64xf32, #tpu.memory_space<vmem>>, vector<1x64xf32>
    %c0_7 = arith.constant 0 : index
    %c0_8 = arith.constant 0 : index
    %4 = vector.load %arg4[%c0_7, %c0_8] : memref<1x64xf32, #tpu.memory_space<vmem>>, vector<1x64xf32>
    %cst = arith.constant dense<0.000000e+00> : vector<16x64xf32>
    %5 = tpu.matmul %0, %1, %cst {dimension_numbers = #tpu.dot_dimension_numbers<[1], [0], [0], [1], [0, 0, 1, 1], [], []>} : vector<16x32xf32>, vector<32x64xf32>, vector<16x64xf32> -> vector<16x64xf32>
    %6 = vector.broadcast %2 : vector<1x64xf32> to vector<16x64xf32>
    %7 = arith.addf %5, %6 : vector<16x64xf32>
    %cst_9 = arith.constant dense<0.000000e+00> : vector<64xf32>
    %8 = vector.multi_reduction <add>, %7, %cst_9 [0] : vector<16x64xf32> to vector<64xf32>
    %9 = vector.shape_cast %8 : vector<64xf32> to vector<1x64xf32>
    %cst_10 = arith.constant 1.600000e+01 : f32
    %10 = vector.broadcast %cst_10 : f32 to vector<1x64xf32>
    %11 = arith.divf %9, %10 : vector<1x64xf32>
    %12 = arith.mulf %7, %7 : vector<16x64xf32>
    %cst_11 = arith.constant dense<0.000000e+00> : vector<64xf32>
    %13 = vector.multi_reduction <add>, %12, %cst_11 [0] : vector<16x64xf32> to vector<64xf32>
    %14 = vector.shape_cast %13 : vector<64xf32> to vector<1x64xf32>
    %cst_12 = arith.constant 1.600000e+01 : f32
    %15 = vector.broadcast %cst_12 : f32 to vector<1x64xf32>
    %16 = arith.divf %14, %15 : vector<1x64xf32>
    %17 = arith.mulf %11, %11 : vector<1x64xf32>
    %18 = arith.subf %16, %17 : vector<1x64xf32>
    %cst_13 = arith.constant 0.000000e+00 : f32
    %19 = vector.broadcast %cst_13 : f32 to vector<1x64xf32>
    %20 = arith.maximumf %18, %19 : vector<1x64xf32>
    %21 = vector.broadcast %11 : vector<1x64xf32> to vector<16x64xf32>
    %22 = arith.subf %7, %21 : vector<16x64xf32>
    %cst_14 = arith.constant 9.99999974E-6 : f32
    %23 = vector.broadcast %cst_14 : f32 to vector<1x64xf32>
    %24 = arith.addf %20, %23 : vector<1x64xf32>
    %25 = math.rsqrt %24 : vector<1x64xf32>
    %26 = vector.broadcast %25 : vector<1x64xf32> to vector<16x64xf32>
    %27 = arith.mulf %22, %26 : vector<16x64xf32>
    %28 = vector.broadcast %3 : vector<1x64xf32> to vector<16x64xf32>
    %29 = arith.mulf %27, %28 : vector<16x64xf32>
    %30 = vector.broadcast %4 : vector<1x64xf32> to vector<16x64xf32>
    %31 = arith.addf %29, %30 : vector<16x64xf32>
    %cst_15 = arith.constant 0.000000e+00 : f32
    %32 = vector.broadcast %cst_15 : f32 to vector<16x64xf32>
    %33 = arith.maximumf %31, %32 : vector<16x64xf32>
    %c0_16 = arith.constant 0 : index
    %c0_17 = arith.constant 0 : index
    %34 = vector.load %arg5[%c0_16, %c0_17] : memref<64x32xf32, #tpu.memory_space<vmem>>, vector<64x32xf32>
    %c0_18 = arith.constant 0 : index
    %c0_19 = arith.constant 0 : index
    %35 = vector.load %arg6[%c0_18, %c0_19] : memref<1x32xf32, #tpu.memory_space<vmem>>, vector<1x32xf32>
    %c0_20 = arith.constant 0 : index
    %c0_21 = arith.constant 0 : index
    %36 = vector.load %arg7[%c0_20, %c0_21] : memref<1x32xf32, #tpu.memory_space<vmem>>, vector<1x32xf32>
    %c0_22 = arith.constant 0 : index
    %c0_23 = arith.constant 0 : index
    %37 = vector.load %arg8[%c0_22, %c0_23] : memref<1x32xf32, #tpu.memory_space<vmem>>, vector<1x32xf32>
    %cst_24 = arith.constant dense<0.000000e+00> : vector<16x32xf32>
    %38 = tpu.matmul %33, %34, %cst_24 {dimension_numbers = #tpu.dot_dimension_numbers<[1], [0], [0], [1], [0, 0, 1, 1], [], []>} : vector<16x64xf32>, vector<64x32xf32>, vector<16x32xf32> -> vector<16x32xf32>
    %39 = vector.broadcast %35 : vector<1x32xf32> to vector<16x32xf32>
    %40 = arith.addf %38, %39 : vector<16x32xf32>
    %cst_25 = arith.constant dense<0.000000e+00> : vector<32xf32>
    %41 = vector.multi_reduction <add>, %40, %cst_25 [0] : vector<16x32xf32> to vector<32xf32>
    %42 = vector.shape_cast %41 : vector<32xf32> to vector<1x32xf32>
    %cst_26 = arith.constant 1.600000e+01 : f32
    %43 = vector.broadcast %cst_26 : f32 to vector<1x32xf32>
    %44 = arith.divf %42, %43 : vector<1x32xf32>
    %45 = arith.mulf %40, %40 : vector<16x32xf32>
    %cst_27 = arith.constant dense<0.000000e+00> : vector<32xf32>
    %46 = vector.multi_reduction <add>, %45, %cst_27 [0] : vector<16x32xf32> to vector<32xf32>
    %47 = vector.shape_cast %46 : vector<32xf32> to vector<1x32xf32>
    %cst_28 = arith.constant 1.600000e+01 : f32
    %48 = vector.broadcast %cst_28 : f32 to vector<1x32xf32>
    %49 = arith.divf %47, %48 : vector<1x32xf32>
    %50 = arith.mulf %44, %44 : vector<1x32xf32>
    %51 = arith.subf %49, %50 : vector<1x32xf32>
    %cst_29 = arith.constant 0.000000e+00 : f32
    %52 = vector.broadcast %cst_29 : f32 to vector<1x32xf32>
    %53 = arith.maximumf %51, %52 : vector<1x32xf32>
    %54 = vector.broadcast %44 : vector<1x32xf32> to vector<16x32xf32>
    %55 = arith.subf %40, %54 : vector<16x32xf32>
    %cst_30 = arith.constant 9.99999974E-6 : f32
    %56 = vector.broadcast %cst_30 : f32 to vector<1x32xf32>
    %57 = arith.addf %53, %56 : vector<1x32xf32>
    %58 = math.rsqrt %57 : vector<1x32xf32>
    %59 = vector.broadcast %58 : vector<1x32xf32> to vector<16x32xf32>
    %60 = arith.mulf %55, %59 : vector<16x32xf32>
    %61 = vector.broadcast %36 : vector<1x32xf32> to vector<16x32xf32>
    %62 = arith.mulf %60, %61 : vector<16x32xf32>
    %63 = vector.broadcast %37 : vector<1x32xf32> to vector<16x32xf32>
    %64 = arith.addf %62, %63 : vector<16x32xf32>
    %cst_31 = arith.constant 0.000000e+00 : f32
    %65 = vector.broadcast %cst_31 : f32 to vector<16x32xf32>
    %66 = arith.maximumf %64, %65 : vector<16x32xf32>
    %67 = arith.truncf %66 : vector<16x32xf32> to vector<16x32xbf16>
    %c0_32 = arith.constant 0 : index
    %c0_33 = arith.constant 0 : index
    %68 = vector.load %arg9[%c0_32, %c0_33] : memref<16x32xbf16, #tpu.memory_space<vmem>>, vector<16x32xbf16>
    tpu.vector_store %arg9[%c0_32, %c0_33], %67 {strides = array<i32>} : memref<16x32xbf16, #tpu.memory_space<vmem>>, vector<16x32xbf16>,
    return
  }
}

</mosaic_0001>

<llo_original>
// kernel: tpu_custom_call.1
$region0: #{tpu_custom_call.1}
  #allocation0 [shape = 'u32[]', space=smem, size = 0x4, offset = 0x4, fixed_abs, tag = 'smem constant byte address 0x4 - core index']
  #allocation1 [shape = 'u32[144,128]{1,0:T(1,128)}', space=vmem, size = 0x12000, scoped, tag = 'internal scratch']
  %s0 = inlined_call_operand.vmem [shape: f32[16,32], index: 0, kind: input, shape index: {}]
  %s1 = inlined_call_operand.vmem [shape: f32[32,64], index: 1, kind: input, shape index: {}]
  %s2 = inlined_call_operand.vmem [shape: f32[1,64], index: 2, kind: input, shape index: {}]
  %s3 = inlined_call_operand.vmem [shape: f32[1,64], index: 3, kind: input, shape index: {}]
  %s4 = inlined_call_operand.vmem [shape: f32[1,64], index: 4, kind: input, shape index: {}]
  %s5 = inlined_call_operand.vmem [shape: f32[64,32], index: 5, kind: input, shape index: {}]
  %s6 = inlined_call_operand.vmem [shape: f32[1,32], index: 6, kind: input, shape index: {}]
  %s7 = inlined_call_operand.vmem [shape: f32[1,32], index: 7, kind: input, shape index: {}]
  %s8 = inlined_call_operand.vmem [shape: f32[1,32], index: 8, kind: input, shape index: {}]
  %s9 = inlined_call_operand.hbm [shape: bf16[16,32], index: 9, kind: output, shape index: {}]
  %s10 = sld [smem:[#allocation0]]
  $region46: #{tpu_custom_call.1} parent=0
    _
  %s12 = ssub.s32 1, %s10
  %s13 = scalar_select 0, %s12, %s10
  $region1: #{tpu_custom_call.1} parent=0
    #allocation2 [shape = 'u8[4096]{0}', space=vmem, size = 0x1000, scoped, tag = 'output window, operand 0, single buffered']
    #allocation3 [shape = 's32[1]{0}', space=sflag, size = 0x4, scoped, tag = 'scoped memory for tpu_custom_call.1']
    %14 = vsyncpa [#allocation3], 0
    // Predicated region
    $region2: #{tpu_custom_call.1} parent=1 // pred_check
      _
    $region3: #{tpu_custom_call.1} parent=1 // pred_check_branch
      %16 = sbr.rel (0) target = $region5
    $region4: #{tpu_custom_call.1} parent=1 // pred_region
      _
    $region5: #{tpu_custom_call.1} parent=1 // pred_fallthru
      _
    // Predicated region
    $region6: #{tpu_custom_call.1} parent=1 // pred_check
      _
    $region7: #{tpu_custom_call.1} parent=1 // pred_check_branch
      %18 = sbr.rel (0) target = $region9
    $region8: #{tpu_custom_call.1} parent=1 // pred_region
      _
    $region9: #{tpu_custom_call.1} parent=1 // pred_fallthru
      _
    // Predicated region
    $region10: #{tpu_custom_call.1} parent=1 // pred_check
      _
    $region11: #{tpu_custom_call.1} parent=1 // pred_check_branch
      %20 = sbr.rel (0) target = $region13
    $region12: #{tpu_custom_call.1} parent=1 // pred_region
      _
    $region13: #{tpu_custom_call.1} parent=1 // pred_fallthru
      _
    // Predicated region
    $region14: #{tpu_custom_call.1} parent=1 // pred_check
      _
    $region15: #{tpu_custom_call.1} parent=1 // pred_check_branch
      %22 = sbr.rel (0) target = $region17
    $region16: #{tpu_custom_call.1} parent=1 // pred_region
      _
    $region17: #{tpu_custom_call.1} parent=1 // pred_fallthru
      _
    // Predicated region
    $region18: #{tpu_custom_call.1} parent=1 // pred_check
      _
    $region19: #{tpu_custom_call.1} parent=1 // pred_check_branch
      %24 = sbr.rel (0) target = $region21
    $region20: #{tpu_custom_call.1} parent=1 // pred_region
      _
    $region21: #{tpu_custom_call.1} parent=1 // pred_fallthru
      _
    // Predicated region
    $region22: #{tpu_custom_call.1} parent=1 // pred_check
      _
    $region23: #{tpu_custom_call.1} parent=1 // pred_check_branch
      %26 = sbr.rel (0) target = $region25
    $region24: #{tpu_custom_call.1} parent=1 // pred_region
      _
    $region25: #{tpu_custom_call.1} parent=1 // pred_fallthru
      _
    // Predicated region
    $region26: #{tpu_custom_call.1} parent=1 // pred_check
      _
    $region27: #{tpu_custom_call.1} parent=1 // pred_check_branch
      %28 = sbr.rel (0) target = $region29
    $region28: #{tpu_custom_call.1} parent=1 // pred_region
      _
    $region29: #{tpu_custom_call.1} parent=1 // pred_fallthru
      _
    // Predicated region
    $region30: #{tpu_custom_call.1} parent=1 // pred_check
      _
    $region31: #{tpu_custom_call.1} parent=1 // pred_check_branch
      %30 = sbr.rel (0) target = $region33
    $region32: #{tpu_custom_call.1} parent=1 // pred_region
      _
    $region33: #{tpu_custom_call.1} parent=1 // pred_fallthru
      _
    // Predicated region
    $region34: #{tpu_custom_call.1} parent=1 // pred_check
      _
    $region35: #{tpu_custom_call.1} parent=1 // pred_check_branch
      %32 = sbr.rel (0) target = $region37
    $region36: #{tpu_custom_call.1} parent=1 // pred_region
      _
    $region37: #{tpu_custom_call.1} parent=1 // pred_fallthru
      _
    %v33 = vld [vmem:[%s0] sm:$0xff]
    %v34 = vld [vmem:[%s0 + $0x8] sm:$0xff]
    %v35 = vld [vmem:[%s1] sm:$0xff]
    %v36 = vld [vmem:[%s1 + $0x8] sm:$0xff]
    %v37 = vld [vmem:[%s1 + $0x10] sm:$0xff]
    %v38 = vld [vmem:[%s1 + $0x18] sm:$0xff]
    %v39 = vld [vmem:[%s2] sm:$0x1]
    %v40 = vld [vmem:[%s3] sm:$0x1]
    %v41 = vld [vmem:[%s4] sm:$0x1]
    %v43 = vlaneseq
    %v44 = vshrl.u32 %v43, 7
    %v45 = vsub.s32 0, %v44
    %v46 = vrot.slane %v39, %v45
    %vm48 = vcmask 261120
    %v50 = vsel %vm48, %v33, 0
    %v53 = vsel %vm48, %v34, 0
    %55 = vmatprep.subr.mxu0 0.0
    %56 = vmatpush1.msra.mxu0 %v35
    %57 = vmatprep.subr.mxu0 0.0
    %58 = vmatpush1.msra.mxu0 %v36
    %59 = vmatprep.subr.mxu0 0.0
    %60 = vmatpush1.msra.mxu0 %v37
    %61 = vmatprep.subr.mxu0 0.0
    %62 = vmatpush1.msra.mxu0 %v38
    %63 = vmatprep.subr.mxu0 0.0
    %64 = vmatpush1.msra.mxu0 0.0
    %65 = vmatprep.subr.mxu0 0.0
    %66 = vmatpush1.msra.mxu0 0.0
    %67 = vmatprep.subr.mxu0 0.0
    %68 = vmatpush1.msra.mxu0 0.0
    %69 = vmatprep.subr.mxu0 0.0
    %70 = vmatpush1.msra.mxu0 0.0
    %71 = vmatprep.subr.mxu0 0.0
    %72 = vmatpush1.msra.mxu0 0.0
    %73 = vmatprep.subr.mxu0 0.0
    %74 = vmatpush1.msra.mxu0 0.0
    %75 = vmatprep.subr.mxu0 0.0
    %76 = vmatpush1.msra.mxu0 0.0
    %77 = vmatprep.subr.mxu0 0.0
    %78 = vmatpush1.msra.mxu0 0.0
    %79 = vmatprep.subr.mxu0 0.0
    %80 = vmatpush1.msra.mxu0 0.0
    %81 = vmatprep.subr.mxu0 0.0
    %82 = vmatpush1.msra.mxu0 0.0
    %83 = vmatprep.subr.mxu0 0.0
    %84 = vmatpush1.msra.mxu0 0.0
    %85 = vmatprep.subr.mxu0 0.0
    %86 = vmatpush1.msra.mxu0 0.0
    %87 = vmatprep.subr.mxu0 0.0
    %88 = vmatpush1.msra.mxu0 0.0
    %89 = vmatprep.subr.mxu0 0.0
    %90 = vmatpush1.msra.mxu0 0.0
    %91 = vmatprep.subr.mxu0 0.0
    %92 = vmatpush1.msra.mxu0 0.0
    %93 = vmatprep.subr.mxu0 0.0
    %94 = vmatpush1.msra.mxu0 0.0
    %95 = vmatprep.subr.mxu0 0.0
    %96 = vmatpush1.msra.mxu0 0.0
    %97 = vmatprep.subr.mxu0 0.0
    %98 = vmatpush1.msra.mxu0 0.0
    %99 = vmatprep.subr.mxu0 0.0
    %100 = vmatpush1.msra.mxu0 0.0
    %101 = vmatprep.subr.mxu0 0.0
    %102 = vmatpush1.msra.mxu0 0.0
    %103 = vmatprep.subr.mxu0 0.0
    %104 = vmatpush1.msra.mxu0 0.0
    %105 = vmatprep.subr.mxu0 0.0
    %106 = vmatpush1.msra.mxu0 0.0
    %107 = vmatprep.subr.mxu0 0.0
    %108 = vmatpush1.msra.mxu0 0.0
    %109 = vmatprep.subr.mxu0 0.0
    %110 = vmatpush1.msra.mxu0 0.0
    %111 = vmatprep.subr.mxu0 0.0
    %112 = vmatpush1.msra.mxu0 0.0
    %113 = vmatprep.subr.mxu0 0.0
    %114 = vmatpush1.msra.mxu0 0.0
    %115 = vmatprep.subr.mxu0 0.0
    %116 = vmatpush1.msra.mxu0 0.0
    %117 = vmatprep.subr.mxu0 0.0
    %118 = vmatpush1.msra.mxu0 0.0
    %119 = vmatprep.mubr.f32.mxu0 0.0
    %120 = vmatmul.mubr.f32.gmra.mrb[0].mxu0 %v50
    %v121 = vpop.f32.mrb[0].mxu0
    %v122 = vadd.f32 %v46, %v121
    %v123 = vpop.f32.mrb[0].mxu0
    %124 = vmatprep.mubr.f32.mxu0 0.0
    %125 = vmatmul.mubr.f32.gmra.mrb[0].mxu0 %v53
    %v126 = vpop.f32.mrb[0].mxu0
    %v127 = vadd.f32 %v46, %v126
    %v128 = vpop.f32.mrb[0].mxu0
    %129 = vdwg.mxu0
    %vm130 = vcmask 523264
    %v131 = vsel %vm130, %v122, 0.0
    %v132 = vsel %vm130, %v127, 0.0
    %v133 = vadd.f32 %v131, %v132
    %v134 = vrot.slane %v133, 4
    %v135 = vadd.f32 %v133, %v134
    %v136 = vrot.slane %v135, 2
    %v137 = vadd.f32 %v135, %v136
    %v138 = vrot.slane %v137, 1
    %v139 = vadd.f32 %v137, %v138
    %v140 = vrcp.pop 16.0
    %v141 = vmul.f32 %v139, %v140
    %v142 = vmul.f32 %v122, %v122
    %v143 = vmul.f32 %v127, %v127
    %v144 = vsel %vm130, %v142, 0.0
    %v145 = vsel %vm130, %v143, 0.0
    %v146 = vadd.f32 %v144, %v145
    %v147 = vrot.slane %v146, 4
    %v148 = vadd.f32 %v146, %v147
    %v149 = vrot.slane %v148, 2
    %v150 = vadd.f32 %v148, %v149
    %v151 = vrot.slane %v150, 1
    %v152 = vadd.f32 %v150, %v151
    %v153 = vmul.f32 %v152, %v140
    %v154 = vmul.f32 %v141, %v141
    %v155 = vsub.f32 %v153, %v154
    %v156 = vmax.f32 %v155, 0.0
    %v157 = vsub.f32 %v122, %v141
    %v158 = vsub.f32 %v127, %v141
    %v159 = vadd.f32 %v156, 1e-05
    %v160 = vrsqrt.pop %v159
    %v161 = vmul.f32 %v157, %v160
    %v162 = vmul.f32 %v158, %v160
    %v164 = vlaneseq
    %v165 = vshrl.u32 %v164, 7
    %v166 = vsub.s32 0, %v165
    %v167 = vrot.slane %v40, %v166
    %v169 = vmul.f32 %v161, %v167
    %v170 = vmul.f32 %v162, %v167
    %v172 = vlaneseq
    %v173 = vshrl.u32 %v172, 7
    %v174 = vsub.s32 0, %v173
    %v175 = vrot.slane %v41, %v174
    %v177 = vadd.f32 %v169, %v175
    %v178 = vadd.f32 %v170, %v175
    %v179 = vmax.f32 %v177, 0.0
    %v180 = vmax.f32 %v178, 0.0
    %v181 = vld [vmem:[%s5] sm:$0xff]
    %v182 = vld [vmem:[%s5 + $0x8] sm:$0xff]
    %v183 = vld [vmem:[%s5 + $0x10] sm:$0xff]
    %v184 = vld [vmem:[%s5 + $0x18] sm:$0xff]
    %v185 = vld [vmem:[%s5 + $0x20] sm:$0xff]
    %v186 = vld [vmem:[%s5 + $0x28] sm:$0xff]
    %v187 = vld [vmem:[%s5 + $0x30] sm:$0xff]
    %v188 = vld [vmem:[%s5 + $0x38] sm:$0xff]
    %v189 = vld [vmem:[%s6] sm:$0x1]
    %v190 = vld [vmem:[%s7] sm:$0x1]
    %v191 = vld [vmem:[%s8] sm:$0x1]
    %v193 = vlaneseq
    %v194 = vshrl.u32 %v193, 7
    %v195 = vsub.s32 0, %v194
    %v196 = vrot.slane %v189, %v195
    %v199 = vsel %vm130, %v179, 0
    %v202 = vsel %vm130, %v180, 0
    %204 = vmatprep.subr.mxu0 0.0
    %205 = vmatpush1.msra.mxu0 %v181
    %206 = vmatprep.subr.mxu0 0.0
    %207 = vmatpush1.msra.mxu0 %v182
    %208 = vmatprep.subr.mxu0 0.0
    %209 = vmatpush1.msra.mxu0 %v183
    %210 = vmatprep.subr.mxu0 0.0
    %211 = vmatpush1.msra.mxu0 %v184
    %212 = vmatprep.subr.mxu0 0.0
    %213 = vmatpush1.msra.mxu0 %v185
    %214 = vmatprep.subr.mxu0 0.0
    %215 = vmatpush1.msra.mxu0 %v186
    %216 = vmatprep.subr.mxu0 0.0
    %217 = vmatpush1.msra.mxu0 %v187
    %218 = vmatprep.subr.mxu0 0.0
    %219 = vmatpush1.msra.mxu0 %v188
    %220 = vmatprep.subr.mxu0 0.0
    %221 = vmatpush1.msra.mxu0 0.0
    %222 = vmatprep.subr.mxu0 0.0
    %223 = vmatpush1.msra.mxu0 0.0
    %224 = vmatprep.subr.mxu0 0.0
    %225 = vmatpush1.msra.mxu0 0.0
    %226 = vmatprep.subr.mxu0 0.0
    %227 = vmatpush1.msra.mxu0 0.0
    %228 = vmatprep.subr.mxu0 0.0
    %229 = vmatpush1.msra.mxu0 0.0
    %230 = vmatprep.subr.mxu0 0.0
    %231 = vmatpush1.msra.mxu0 0.0
    %232 = vmatprep.subr.mxu0 0.0
    %233 = vmatpush1.msra.mxu0 0.0
    %234 = vmatprep.subr.mxu0 0.0
    %235 = vmatpush1.msra.mxu0 0.0
    %236 = vmatprep.subr.mxu0 0.0
    %237 = vmatpush1.msra.mxu0 0.0
    %238 = vmatprep.subr.mxu0 0.0
    %239 = vmatpush1.msra.mxu0 0.0
    %240 = vmatprep.subr.mxu0 0.0
    %241 = vmatpush1.msra.mxu0 0.0
    %242 = vmatprep.subr.mxu0 0.0
    %243 = vmatpush1.msra.mxu0 0.0
    %244 = vmatprep.subr.mxu0 0.0
    %245 = vmatpush1.msra.mxu0 0.0
    %246 = vmatprep.subr.mxu0 0.0
    %247 = vmatpush1.msra.mxu0 0.0
    %248 = vmatprep.subr.mxu0 0.0
    %249 = vmatpush1.msra.mxu0 0.0
    %250 = vmatprep.subr.mxu0 0.0
    %251 = vmatpush1.msra.mxu0 0.0
    %252 = vmatprep.subr.mxu0 0.0
    %253 = vmatpush1.msra.mxu0 0.0
    %254 = vmatprep.subr.mxu0 0.0
    %255 = vmatpush1.msra.mxu0 0.0
    %256 = vmatprep.subr.mxu0 0.0
    %257 = vmatpush1.msra.mxu0 0.0
    %258 = vmatprep.subr.mxu0 0.0
    %259 = vmatpush1.msra.mxu0 0.0
    %260 = vmatprep.subr.mxu0 0.0
    %261 = vmatpush1.msra.mxu0 0.0
    %262 = vmatprep.subr.mxu0 0.0
    %263 = vmatpush1.msra.mxu0 0.0
    %264 = vmatprep.subr.mxu0 0.0
    %265 = vmatpush1.msra.mxu0 0.0
    %266 = vmatprep.subr.mxu0 0.0
    %267 = vmatpush1.msra.mxu0 0.0
    %268 = vmatprep.mubr.f32.mxu0 0.0
    %269 = vmatmul.mubr.f32.gmra.mrb[0].mxu0 %v199
    %v270 = vpop.f32.mrb[0].mxu0
    %v271 = vadd.f32 %v196, %v270
    %v272 = vpop.f32.mrb[0].mxu0
    %273 = vmatprep.mubr.f32.mxu0 0.0
    %274 = vmatmul.mubr.f32.gmra.mrb[0].mxu0 %v202
    %v275 = vpop.f32.mrb[0].mxu0
    %v276 = vadd.f32 %v196, %v275
    %v277 = vpop.f32.mrb[0].mxu0
    %278 = vdwg.mxu0
    %v279 = vsel %vm48, %v271, 0.0
    %v280 = vsel %vm48, %v276, 0.0
    %v281 = vadd.f32 %v279, %v280
    %v282 = vrot.slane %v281, 4
    %v283 = vadd.f32 %v281, %v282
    %v284 = vrot.slane %v283, 2
    %v285 = vadd.f32 %v283, %v284
    %v286 = vrot.slane %v285, 1
    %v287 = vadd.f32 %v285, %v286
    %v288 = vmul.f32 %v287, %v140
    %v289 = vmul.f32 %v271, %v271
    %v290 = vmul.f32 %v276, %v276
    %v291 = vsel %vm48, %v289, 0.0
    %v292 = vsel %vm48, %v290, 0.0
    %v293 = vadd.f32 %v291, %v292
    %v294 = vrot.slane %v293, 4
    %v295 = vadd.f32 %v293, %v294
    %v296 = vrot.slane %v295, 2
    %v297 = vadd.f32 %v295, %v296
    %v298 = vrot.slane %v297, 1
    %v299 = vadd.f32 %v297, %v298
    %v300 = vmul.f32 %v299, %v140
    %v301 = vmul.f32 %v288, %v288
    %v302 = vsub.f32 %v300, %v301
    %v303 = vmax.f32 %v302, 0.0
    %v304 = vsub.f32 %v271, %v288
    %v305 = vsub.f32 %v276, %v288
    %v306 = vadd.f32 %v303, 1e-05
    %v307 = vrsqrt.pop %v306
    %v308 = vmul.f32 %v304, %v307
    %v309 = vmul.f32 %v305, %v307
    %v311 = vlaneseq
    %v312 = vshrl.u32 %v311, 7
    %v313 = vsub.s32 0, %v312
    %v314 = vrot.slane %v190, %v313
    %v316 = vmul.f32 %v308, %v314
    %v317 = vmul.f32 %v309, %v314
    %v319 = vlaneseq
    %v320 = vshrl.u32 %v319, 7
    %v321 = vsub.s32 0, %v320
    %v322 = vrot.slane %v191, %v321
    %v324 = vadd.f32 %v316, %v322
    %v325 = vadd.f32 %v317, %v322
    %v326 = vmax.f32 %v324, 0.0
    %v327 = vmax.f32 %v325, 0.0
    %v328 = vpack.c.bf16 %v327, %v326
    %v330 = vunpack.c.l.b16 %v328
    %v331 = vunpack.c.h.b16 %v328
    %v332 = vpack.c.b16 %v330, %v330
    %v333 = vpack.c.b16 %v331, %v331
    %vm336 = vcmask 257024
    %337 = vst.msk [vmem:[#allocation2] sm:$0xf] %vm336, %v332
    %338 = vst.msk [vmem:[#allocation2 + $0x4] sm:$0xf] %vm336, %v333
    // Predicated region
    $region38: #{tpu_custom_call.1} parent=1 // pred_check
      _
    $region39: #{tpu_custom_call.1} parent=1 // pred_check_branch
      %340 = sbr.rel (0) target = $region41
    $region40: #{tpu_custom_call.1} parent=1 // pred_region
      %s342 = ssub.s32 128, 128
      %343 = vsyncadd [#allocation3], %s342
      %s344 = sshll.u32 [#allocation2], 4
      %s345 = int_to_ptr.vmem [resolvable:$true] %s344
      %350 = dma.vmem_to_hbm [thread:$0]  %s345, 128, %s9, [#allocation3], 64, 64, 4
    $region41: #{tpu_custom_call.1} parent=1 // pred_fallthru
      _
    // Predicated region
    $region42: #{tpu_custom_call.1} parent=1 // pred_check
      _
    $region43: #{tpu_custom_call.1} parent=1 // pred_check_branch
      %352 = sbr.rel (0) target = $region45
    $region44: #{tpu_custom_call.1} parent=1 // pred_region
      %353 = dma.done [#allocation3], 128
    $region45: #{tpu_custom_call.1} parent=1 // pred_fallthru
      _
    %354 = vsyncpa [#allocation3], 1

</llo_original>
